<compile_context>
chip_gen: v6e
topology: v6e:2x2x1
jax: 0.10.0
libtpu: 0.0.40
codegen_flags: <defaults>
</compile_context>

<pallas_src>
import functools

import jax
import jax.numpy as jnp
from jax.experimental import pallas as pl
from jax.experimental.pallas import tpu as pltpu


def _make_ce_kernel(batch_size: int, tile_b: int, ragged: bool):
    def ce_kernel(logits_ref, labels_ref, out_ref):
        i = pl.program_id(0)

        logits = logits_ref[...].astype(jnp.float32)     # (TB, C) -> f32 in vregs
        labels = labels_ref[...]                         # (TB, 1) int32

        # Gather the label logit from the RAW logits (independent of the
        # max/exp dependency chain -> better VLIW overlap).
        cls_ids = jax.lax.broadcasted_iota(jnp.int32, logits.shape, 1)
        logit_at_label = jnp.sum(
            jnp.where(cls_ids == labels, logits, 0.0),
            axis=-1, keepdims=True)                      # (TB, 1)

        # Numerically-stable logsumexp over the class (lane) axis.
        m = jnp.max(logits, axis=-1, keepdims=True)      # (TB, 1)
        lse = jnp.log(jnp.sum(jnp.exp(logits - m), axis=-1, keepdims=True))

        ce = (m + lse) - logit_at_label                  # (TB, 1)  == -log_softmax[label]

        if ragged:
            # Only emitted when B % TB != 0: mask batch-padding rows so the
            # mean is exact (jnp.where also swallows any NaN/Inf from the
            # uninitialized rows of the partial final block).
            row_ids = i * tile_b + jax.lax.broadcasted_iota(jnp.int32, ce.shape, 0)
            ce = jnp.where(row_ids < batch_size, ce, 0.0)

        # Lane-dense per-tile partial sum (no cross-tile carry -> the batch
        # axis is truly parallel and can be sharded across TensorCores).
        partial = jnp.sum(ce)                            # scalar f32
        out_ref[...] = jnp.broadcast_to(partial.reshape(1, 1, 1), (1, 8, 128))

    return ce_kernel


def _vmem_capacity_bytes() -> int:
    try:
        cap = getattr(pltpu.get_tpu_info(), "vmem_capacity_bytes", None)
        if cap:
            return int(cap)
    except Exception:
        pass
    return 64 * 1024 * 1024   # conservative default (v7x per-TC)


@functools.partial(jax.jit, static_argnames=("loss_weight",))
def hecto_criterion(pred_logits: jax.Array, labels: jax.Array,
                    loss_weight: float = 1.0) -> dict:
    """pred_logits: [B, C] (f32 or bf16), labels: [B] int -> {'ce_loss': f32 scalar}."""
    B, C = pred_logits.shape
    itemsize = jnp.dtype(pred_logits.dtype).itemsize
    sublane = 8 if itemsize >= 4 else (16 if itemsize == 2 else 32)

    # --- generation-aware tiling ------------------------------------------
    vmem_cap = _vmem_capacity_bytes()
    # per-buffer budget: 8 MiB on 64 MiB parts (v7x), 12 MiB on 128 MiB parts.
    tile_budget = max(4 << 20, min(12 << 20, vmem_cap // 8))
    c_lane = ((C + 127) // 128) * 128          # physical lane footprint per row
    tb_cap = max(sublane,
                 (tile_budget // max(1, c_lane * itemsize)) // sublane * sublane)
    TB = int(min(2048, tb_cap, ((B + sublane - 1) // sublane) * sublane))
    num_tiles = -(-B // TB)
    ragged = (B % TB) != 0

    buf_bytes = TB * c_lane * itemsize         # logits tile (native dtype)
    lbl_bytes = TB * 128 * 4                   # labels tile (lane-padded int32)
    vmem_limit = int(min(vmem_cap * 3 // 4,
                         max(16 << 20, 2 * (buf_bytes + lbl_bytes) + (4 << 20))))

    labels_col = labels.astype(jnp.int32).reshape(B, 1)   # cheap (B*4 bytes)

    cost = pl.CostEstimate(
        flops=5 * B * C,
        transcendentals=B * C,
        bytes_accessed=B * C * itemsize + B * 4 + num_tiles * 8 * 128 * 4,
    )

    partials = pl.pallas_call(
        _make_ce_kernel(B, TB, ragged),
        out_shape=jax.ShapeDtypeStruct((num_tiles, 8, 128), jnp.float32),
        grid=(num_tiles,),
        in_specs=[
            # Class dim = full C (legal even when C % 128 != 0); no pad copy.
            pl.BlockSpec((TB, C), lambda i: (i, 0)),
            pl.BlockSpec((TB, 1), lambda i: (i, 0)),
        ],
        out_specs=pl.BlockSpec((1, 8, 128), lambda i: (i, 0, 0)),
        compiler_params=pltpu.CompilerParams(
            dimension_semantics=("parallel",),   # independent tiles -> megacore-shardable
            vmem_limit_bytes=vmem_limit,
        ),
        cost_estimate=cost,
    )(pred_logits, labels_col)

    # Tiny finalize in the wrapper: sum the per-tile partials, mean + weight.
    loss = jnp.sum(partials[:, 0, 0]) * jnp.float32(float(loss_weight) / float(B))
    return {'ce_loss': loss}


def _reference(logits, labels, loss_weight):
    log_probs = jax.nn.log_softmax(logits.astype(jnp.float32), axis=-1)
    picked = jnp.take_along_axis(log_probs, labels.astype(jnp.int32)[:, None], axis=1)
    return -jnp.mean(picked) * loss_weight


if __name__ == "__main__":
    key = jax.random.PRNGKey(0)
    k_logits, k_labels = jax.random.split(key)

    # Primary case consistent with the module: batch=8, num_classes=32.
    B, C = 8, 32
    pred_logits = jax.random.normal(k_logits, (B, C), dtype=jnp.float32)
    labels = jax.random.randint(k_labels, (B,), 0, C, dtype=jnp.int32)

    out = hecto_criterion(pred_logits, labels, loss_weight=1.0)
    loss = jax.block_until_ready(out['ce_loss'])
    ref = _reference(pred_logits, labels, 1.0)
    assert jnp.allclose(loss, ref, atol=1e-5, rtol=1e-5), (loss, ref)

    # Ragged batch + non-128-multiple class count (exercises in-kernel masks).
    B2, C2 = 13, 200
    logits2 = jax.random.normal(k_logits, (B2, C2), dtype=jnp.float32)
    labels2 = jax.random.randint(k_labels, (B2,), 0, C2, dtype=jnp.int32)
    loss2 = jax.block_until_ready(hecto_criterion(logits2, labels2, loss_weight=0.5)['ce_loss'])
    ref2 = _reference(logits2, labels2, 0.5)
    assert jnp.allclose(loss2, ref2, atol=1e-5, rtol=1e-5), (loss2, ref2)

    # bf16 logits stay bf16 in HBM; kernel upcasts after load (TB rounds to 16).
    B3, C3 = 16, 256
    logits3 = jax.random.normal(k_logits, (B3, C3), dtype=jnp.bfloat16)
    labels3 = jax.random.randint(k_labels, (B3,), 0, C3, dtype=jnp.int32)
    loss3 = jax.block_until_ready(hecto_criterion(logits3, labels3, loss_weight=1.0)['ce_loss'])
    ref3 = _reference(logits3, labels3, 1.0)
    assert jnp.allclose(loss3, ref3, atol=1e-3, rtol=1e-3), (loss3, ref3)

    print("KERNEL_OK")
</pallas_src>

<mosaic_0001>
module attributes {stable_mosaic.version = 11 : i64} {
  func.func @ce_kernel(%arg0: i32, %arg1: memref<8x32xf32, #tpu.memory_space<vmem>>, %arg2: memref<8x1xi32, #tpu.memory_space<vmem>>, %arg3: memref<1x8x128xf32, #tpu.memory_space<vmem>>) attributes {dimension_semantics = [#tpu.dimension_semantics<parallel>], iteration_bounds = array<i64: 1>, scalar_prefetch = 0 : i64, scratch_operands = 0 : i64, tpu.core_type = #tpu.core_type<tc>, window_params = [{transform_indices = @transform_0, window_bounds = array<i64: 8, 32>}, {transform_indices = @transform_1, window_bounds = array<i64: 8, 1>}, {transform_indices = @transform_2, window_bounds = array<i64: 1, 8, 128>}]} {
    %c0 = arith.constant 0 : index
    %c0_0 = arith.constant 0 : index
    %0 = vector.load %arg1[%c0, %c0_0] : memref<8x32xf32, #tpu.memory_space<vmem>>, vector<8x32xf32>
    %c0_1 = arith.constant 0 : index
    %c0_2 = arith.constant 0 : index
    %1 = vector.load %arg2[%c0_1, %c0_2] : memref<8x1xi32, #tpu.memory_space<vmem>>, vector<8x1xi32>
    %2 = tpu.iota {dimensions = array<i32: 1>} : vector<8x32xi32>
    %3 = vector.broadcast %1 : vector<8x1xi32> to vector<8x32xi32>
    %4 = arith.cmpi eq, %2, %3 : vector<8x32xi32>
    %cst = arith.constant 0.000000e+00 : f32
    %5 = vector.broadcast %cst : f32 to vector<8x32xf32>
    %6 = arith.select %4, %0, %5 : vector<8x32xi1>, vector<8x32xf32>
    %cst_3 = arith.constant dense<0.000000e+00> : vector<8xf32>
    %7 = vector.multi_reduction <add>, %6, %cst_3 [1] : vector<8x32xf32> to vector<8xf32>
    %8 = vector.shape_cast %7 : vector<8xf32> to vector<8x1xf32>
    %cst_4 = arith.constant dense<0xFF800000> : vector<8xf32>
    %9 = vector.multi_reduction <maximumf>, %0, %cst_4 [1] : vector<8x32xf32> to vector<8xf32>
    %10 = vector.shape_cast %9 : vector<8xf32> to vector<8x1xf32>
    %11 = vector.broadcast %10 : vector<8x1xf32> to vector<8x32xf32>
    %12 = arith.subf %0, %11 : vector<8x32xf32>
    %13 = math.exp %12 : vector<8x32xf32>
    %cst_5 = arith.constant dense<0.000000e+00> : vector<8xf32>
    %14 = vector.multi_reduction <add>, %13, %cst_5 [1] : vector<8x32xf32> to vector<8xf32>
    %15 = vector.shape_cast %14 : vector<8xf32> to vector<8x1xf32>
    %16 = math.log %15 : vector<8x1xf32>
    %17 = arith.addf %10, %16 : vector<8x1xf32>
    %18 = arith.subf %17, %8 : vector<8x1xf32>
    %19 = vector.shape_cast %18 : vector<8x1xf32> to vector<1x8x1xf32>
    %cst_6 = arith.constant dense<0.000000e+00> : vector<1xf32>
    %20 = vector.multi_reduction <add>, %19, %cst_6 [1, 2] : vector<1x8x1xf32> to vector<1xf32>
    %21 = vector.shape_cast %20 : vector<1xf32> to vector<1x1x1xf32>
    %22 = vector.extract %21[0, 0, 0] : f32 from vector<1x1x1xf32>
    %23 = vector.broadcast %22 : f32 to vector<1x1x1xf32>
    %24 = vector.shape_cast %23 : vector<1x1x1xf32> to vector<1x1x1xf32>
    %25 = vector.broadcast %24 : vector<1x1x1xf32> to vector<1x8x128xf32>
    %c0_7 = arith.constant 0 : index
    %c0_8 = arith.constant 0 : index
    %c0_9 = arith.constant 0 : index
    %26 = vector.load %arg3[%c0_7, %c0_8, %c0_9] : memref<1x8x128xf32, #tpu.memory_space<vmem>>, vector<1x8x128xf32>
    tpu.vector_store %arg3[%c0_7, %c0_8, %c0_9], %25 {strides = array<i32>} : memref<1x8x128xf32, #tpu.memory_space<vmem>>, vector<1x8x128xf32>,
    return
  }
  func.func @transform_0(%arg0: i32) -> (i32, i32) {
    %c0_i32 = arith.constant 0 : i32
    %c0_i32_0 = arith.constant 0 : i32
    return %arg0, %c0_i32 : i32, i32
  }
  func.func @transform_1(%arg0: i32) -> (i32, i32) {
    %c0_i32 = arith.constant 0 : i32
    %c0_i32_0 = arith.constant 0 : i32
    return %arg0, %c0_i32 : i32, i32
  }
  func.func @transform_2(%arg0: i32) -> (i32, i32, i32) {
    %c0_i32 = arith.constant 0 : i32
    %c0_i32_0 = arith.constant 0 : i32
    %c0_i32_1 = arith.constant 0 : i32
    return %arg0, %c0_i32, %c0_i32_0 : i32, i32, i32
  }
}

</mosaic_0001>

<llo_original>
// kernel: hecto_criterion.1
$region0: #{hecto_criterion.1}
  #allocation0 [shape = 'u32[]', space=smem, size = 0x4, offset = 0x4, fixed_abs, tag = 'smem constant byte address 0x4 - core index']
  #allocation1 [shape = 'u32[144,128]{1,0:T(1,128)}', space=vmem, size = 0x12000, scoped, tag = 'internal scratch']
  %s0 = inlined_call_operand.vmem [shape: f32[8,32], index: 0, kind: input, shape index: {}]
  %s1 = inlined_call_operand.vmem [shape: s32[8,1], index: 1, kind: input, shape index: {}]
  %s2 = inlined_call_operand.vmem [shape: f32[1,8,128], index: 2, kind: output, shape index: {}]
  %s3 = sld [smem:[#allocation0]]
  $region18: #{hecto_criterion.1} parent=0
    _
  %s5 = ssub.s32 1, %s3
  %s6 = scalar_select 0, %s5, %s3
  // Predicated region
  $region2: #{hecto_criterion.1} parent=0 // pred_check
    _
  $region3: #{hecto_criterion.1} parent=0 // pred_check_branch
    %8 = sbr.rel (0) target = $region5
  $region4: #{hecto_criterion.1} parent=0 // pred_region
    _
  $region5: #{hecto_criterion.1} parent=0 // pred_fallthru
    _
  // Predicated region
  $region6: #{hecto_criterion.1} parent=0 // pred_check
    _
  $region7: #{hecto_criterion.1} parent=0 // pred_check_branch
    %10 = sbr.rel (0) target = $region9
  $region8: #{hecto_criterion.1} parent=0 // pred_region
    _
  $region9: #{hecto_criterion.1} parent=0 // pred_fallthru
    _
  %v11 = vld [vmem:[%s0] sm:$0xff]
  %v12 = vld [vmem:[%s1] sm:$0xff]
  %v13 = vlaneseq
  %v14 = vand.u32 %v13, 127
  %15 = vset.pattern.permute.xlu0 0
  %16 = vperm.xlu0 %15, %v12
  %v17 = vpop.permute.xlu0 %16
  %vm18 = vcmp.eq.s32.totalorder %v14, %v17
  %v19 = vsel %vm18, %v11, 0.0
  %vm20 = vcmask 261120
  %v21 = vsel %vm20, %v19, 0.0
  %22 = vadd.xlane.f32.xlu0 %v21
  %v23 = vpop.xlane.xlu0 %22
  %v24 = vsel %vm20, %v11, -inf
  %25 = vmax.xlane.f32.xlu0 %v24
  %v26 = vpop.xlane.xlu0 %25
  %v27 = vsub.f32 %v11, %v26
  %v28 = vmul.f32 %v27, 1.442695
  %v29 = vpow.pop %v28
  %v30 = vsel %vm20, %v29, 0.0
  %31 = vadd.xlane.f32.xlu0 %v30
  %v32 = vpop.xlane.xlu0 %31
  %v33 = vlog2.pop %v32
  %v34 = vmul.f32 %v33, 0.6931472
  %v35 = vadd.f32 %v26, %v34
  %v36 = vsub.f32 %v35, %v23
  %vm37 = vcmask 7168
  %v38 = vsel %vm37, %v36, 0.0
  %39 = vadd.xlane.f32.xlu0 %v38
  %v40 = vpop.xlane.xlu0 %39
  %v41 = vrot.slane %v40, 4
  %v42 = vadd.f32 %v40, %v41
  %v43 = vrot.slane %v42, 2
  %v44 = vadd.f32 %v42, %v43
  %v45 = vrot.slane %v44, 1
  %v46 = vadd.f32 %v44, %v45
  %s47 = vtos %v46
  %v48 = vstv %s47
  %49 = vst [vmem:[%s2] sm:$0xff] %v48
  // Predicated region
  $region10: #{hecto_criterion.1} parent=0 // pred_check
    _
  $region11: #{hecto_criterion.1} parent=0 // pred_check_branch
    %51 = sbr.rel (0) target = $region13
  $region12: #{hecto_criterion.1} parent=0 // pred_region
    _
  $region13: #{hecto_criterion.1} parent=0 // pred_fallthru
    _
  // Predicated region
  $region14: #{hecto_criterion.1} parent=0 // pred_check
    _
  $region15: #{hecto_criterion.1} parent=0 // pred_check_branch
    %53 = sbr.rel (0) target = $region17
  $region16: #{hecto_criterion.1} parent=0 // pred_region
    _
  $region17: #{hecto_criterion.1} parent=0 // pred_fallthru
    _

</llo_original>
